<compile_context>
chip_gen: v5e
topology: v5e:2x2
jax: 0.10.0
libtpu: 0.0.40
codegen_flags: <defaults>
</compile_context>

<pallas_src>
import functools

import jax
import jax.numpy as jnp
from jax import lax
from jax.experimental import pallas as pl
from jax.experimental.pallas import tpu as pltpu


# ----------------------------------------------------------------------------- helpers
_BN_EPS = 1e-5  # torch.nn.BatchNorm1d default


def _softplus(x):
    # Matches PyTorch nn.Softplus(beta=1, threshold=20): log(1+exp(x)), identity for x>20.
    return jnp.where(x > 20.0, x, jnp.log1p(jnp.exp(jnp.minimum(x, 20.0))))


def decreasing_node(node_in, node_out, hidden_layer):
    # Mirrors nodeframe.decreasingNode(get_allNode=True): geometrically decreasing widths.
    factor = (float(node_in) / float(node_out)) ** (1.0 / (hidden_layer + 1))
    hidden = [int(round(node_in / factor ** (i + 1))) for i in range(hidden_layer)]
    return [int(node_in)] + hidden + [int(node_out)]


def _fold_bn_into_linear(w, b, bn):
    """Exactly fold eval-mode BatchNorm1d into the preceding Linear: y = x@W' + b'."""
    gamma, beta, mean, var = bn
    s = gamma / jnp.sqrt(var + _BN_EPS)
    t = beta - mean * s
    w_f = w * s[None, :]            # column scale
    b_f = (b * s + t).reshape(1, -1)
    return w_f, b_f


# ----------------------------------------------------------------------------- kernel
def _mb_mlp_kernel(branch_in_slices, branch_layer_counts, trunk_hidden_count,
                   node_out, bias_slices, *refs):
    """refs = [x_packed,
               branch weights (BN-folded, in traversal order),
               trunk first-layer weights split per branch,
               remaining trunk hidden weights,
               trunk final weight,
               bias_packed,
               out (B, 2*node_out)]"""
    n_branch = len(branch_layer_counts)
    n_branch_w = sum(branch_layer_counts)

    idx = 0
    x_ref = refs[idx]; idx += 1
    branch_w = refs[idx:idx + n_branch_w]; idx += n_branch_w
    trunk0_w = refs[idx:idx + n_branch]; idx += n_branch
    trunk_rest_w = refs[idx:idx + (trunk_hidden_count - 1)]
    idx += trunk_hidden_count - 1
    trunk_final_w = refs[idx]; idx += 1
    bias_ref = refs[idx]; idx += 1
    out_ref = refs[idx]

    x_all = x_ref[...]          # (B, sum_in)  -- single input DMA
    biases = bias_ref[...]      # (1, sum_bias) -- single bias DMA
    bias_it = iter(bias_slices)

    def next_bias():
        off, d = next(bias_it)
        return biases[:, off:off + d]

    # ---- branches: (Linear with folded BN) -> Softplus, repeated
    w_i = 0
    branch_outs = []
    for b in range(n_branch):
        off, d = branch_in_slices[b]
        h = x_all[:, off:off + d]
        for _ in range(branch_layer_counts[b]):
            w = branch_w[w_i]; w_i += 1
            h = jnp.dot(h, w[...], preferred_element_type=jnp.float32) + next_bias()
            h = _softplus(h)
        branch_outs.append(h)

    # ---- trunk hidden layer 0: concat(branches) @ W  ==  sum_b branch_b @ W_b
    acc = next_bias()
    for b in range(n_branch):
        acc = acc + jnp.dot(branch_outs[b], trunk0_w[b][...],
                            preferred_element_type=jnp.float32)
    h = _softplus(acc)

    # ---- remaining trunk hidden layers
    for li in range(trunk_hidden_count - 1):
        h = jnp.dot(h, trunk_rest_w[li][...],
                    preferred_element_type=jnp.float32) + next_bias()
        h = _softplus(h)

    # ---- trunk final Linear (no BN) as ONE matmul; softplus only on the sigma half
    out = jnp.dot(h, trunk_final_w[...],
                  preferred_element_type=jnp.float32) + next_bias()
    col = lax.broadcasted_iota(jnp.int32, out.shape, 1)
    out_ref[...] = jnp.where(col >= node_out, _softplus(out), out).astype(out_ref.dtype)


# ----------------------------------------------------------------------------- wrapper
def multi_branch_mlp_gaussian(x_all, params):
    """Forward pass. x_all: list of (B, nodes_in[i]) float32 arrays.
    Returns (params, sigma), each (B, node_out)."""
    node_out = params["node_out"]
    B = x_all[0].shape[0]

    # Pack branch inputs into one (B, sum_in) operand; record static lane slices.
    branch_in_slices = []
    xs = []
    off = 0
    for x in x_all:
        x = x.astype(jnp.float32)
        xs.append(x)
        branch_in_slices.append((off, x.shape[1]))
        off += x.shape[1]
    x_packed = jnp.concatenate(xs, axis=1)

    # Fold BN into Linear weights and collect weights / biases in kernel traversal order.
    branch_weights = []
    bias_arrays = []
    branch_layer_counts = []
    branch_out_dims = []
    for layers in params["branches"]:
        branch_layer_counts.append(len(layers))
        for (w, b, bn) in layers:
            w_f, b_f = _fold_bn_into_linear(w, b, bn)
            branch_weights.append(w_f)
            bias_arrays.append(b_f)
        branch_out_dims.append(layers[-1][0].shape[1])

    trunk_hidden = params["trunk_hidden"]
    # trunk hidden layer 0: fold BN, then pre-split rows per branch (tile-aligned operands)
    w0, b0, bn0 = trunk_hidden[0]
    w0_f, b0_f = _fold_bn_into_linear(w0, b0, bn0)
    trunk0_weights = []
    r = 0
    for d in branch_out_dims:
        trunk0_weights.append(w0_f[r:r + d, :])
        r += d
    bias_arrays.append(b0_f)

    trunk_rest_weights = []
    for (w, b, bn) in trunk_hidden[1:]:
        w_f, b_f = _fold_bn_into_linear(w, b, bn)
        trunk_rest_weights.append(w_f)
        bias_arrays.append(b_f)

    w_fin, b_fin = params["trunk_final"]
    bias_arrays.append(b_fin.reshape(1, -1))

    # Pack all biases into one (1, sum_N) operand; record static lane slices.
    bias_slices = []
    boff = 0
    for b in bias_arrays:
        d = b.shape[-1]
        bias_slices.append((boff, d))
        boff += d
    bias_packed = jnp.concatenate(bias_arrays, axis=1)

    flat = ([x_packed] + branch_weights + trunk0_weights + trunk_rest_weights
            + [w_fin, bias_packed])

    kern = functools.partial(
        _mb_mlp_kernel,
        tuple(branch_in_slices),
        tuple(branch_layer_counts),
        len(trunk_hidden),
        node_out,
        tuple(bias_slices),
    )

    vmem = pl.BlockSpec(memory_space=pltpu.MemorySpace.VMEM)
    out = pl.pallas_call(
        kern,
        out_shape=jax.ShapeDtypeStruct((B, 2 * node_out), jnp.float32),
        in_specs=[vmem] * len(flat),
        out_specs=vmem,
    )(*flat)

    # Gaussian head split (softplus on the sigma half was already done in-kernel).
    return out[:, :node_out], out[:, node_out:]

    # TODO(synk): if batch is ever scaled to thousands of rows, add a 1-D batch grid
    # (block ~512-1024 rows) with dimension_semantics=("parallel",) for megacore use.


# ----------------------------------------------------------------------------- init
def init_model(key, nodes_in=(32, 24, 40), node_out=2,
               branch_hiddenLayer=1, trunk_hiddenLayer=1):
    """Deterministic parameter init mirroring MultiBranchMLPGaussian.__init__ shapes."""
    fc_hidden = branch_hiddenLayer * 2 + 1
    fc_out = node_out * 2
    nodes_all, branches_out = [], []
    for ni in nodes_in:
        fc_node = decreasing_node(ni, fc_out, fc_hidden)
        nb = fc_node[:branch_hiddenLayer + 2]
        nodes_all.append(nb)
        branches_out.append(nb[-1])
    trunk_nodes = decreasing_node(sum(branches_out), fc_out, trunk_hiddenLayer)

    def linear_init(k, fan_in, fan_out):
        k1, k2 = jax.random.split(k)
        bound = 1.0 / (fan_in ** 0.5)
        w = jax.random.uniform(k1, (fan_in, fan_out), jnp.float32, -bound, bound)
        b = jax.random.uniform(k2, (fan_out,), jnp.float32, -bound, bound)
        return w, b

    def bn_init(k, n):
        k1, k2, k3, k4 = jax.random.split(k, 4)
        gamma = 1.0 + 0.1 * jax.random.normal(k1, (n,), jnp.float32)
        beta = 0.1 * jax.random.normal(k2, (n,), jnp.float32)
        mean = 0.1 * jax.random.normal(k3, (n,), jnp.float32)
        var = 1.0 + 0.1 * jnp.abs(jax.random.normal(k4, (n,), jnp.float32))
        return gamma, beta, mean, var

    branches = []
    for nb in nodes_all:
        layers = []
        for i in range(len(nb) - 1):
            key, kl, kb = jax.random.split(key, 3)
            w, b = linear_init(kl, nb[i], nb[i + 1])
            layers.append((w, b, bn_init(kb, nb[i + 1])))
        branches.append(layers)

    trunk_hidden = []
    for i in range(len(trunk_nodes) - 2):  # hidden trunk layers (Linear+BN+Softplus)
        key, kl, kb = jax.random.split(key, 3)
        w, b = linear_init(kl, trunk_nodes[i], trunk_nodes[i + 1])
        trunk_hidden.append((w, b, bn_init(kb, trunk_nodes[i + 1])))
    key, kl = jax.random.split(key)
    trunk_final = linear_init(kl, trunk_nodes[-2], trunk_nodes[-1])

    return {
        "branches": branches,
        "trunk_hidden": trunk_hidden,
        "trunk_final": trunk_final,
        "node_out": node_out,
        "nodes_in": list(nodes_in),
    }


# ----------------------------------------------------------------------------- reference
def multi_branch_mlp_gaussian_ref(x_all, params):
    node_out = params["node_out"]
    outs = []
    for x, layers in zip(x_all, params["branches"]):
        h = x
        for (w, b, (g, bt, m, v)) in layers:
            h = h @ w + b
            h = (h - m) / jnp.sqrt(v + _BN_EPS) * g + bt
            h = _softplus(h)
        outs.append(h)
    h = jnp.concatenate(outs, axis=1)
    for (w, b, (g, bt, m, v)) in params["trunk_hidden"]:
        h = h @ w + b
        h = (h - m) / jnp.sqrt(v + _BN_EPS) * g + bt
        h = _softplus(h)
    w, b = params["trunk_final"]
    out = h @ w + b
    return out[:, :node_out], _softplus(out[:, node_out:])


# ----------------------------------------------------------------------------- main
if __name__ == "__main__":
    key = jax.random.PRNGKey(0)
    key, kp = jax.random.split(key)

    nodes_in = (32, 24, 40)   # small multi-branch inputs
    node_out = 2
    batch = 8

    params = init_model(kp, nodes_in=nodes_in, node_out=node_out,
                        branch_hiddenLayer=1, trunk_hiddenLayer=1)

    x_all = []
    for ni in nodes_in:
        key, kx = jax.random.split(key)
        x_all.append(jax.random.normal(kx, (batch, ni), jnp.float32))

    mu, sigma = multi_branch_mlp_gaussian(x_all, params)
    mu, sigma = jax.block_until_ready((mu, sigma))

    mu_ref, sigma_ref = multi_branch_mlp_gaussian_ref(x_all, params)
    assert mu.shape == (batch, node_out) and sigma.shape == (batch, node_out)
    assert jnp.allclose(mu, mu_ref, rtol=1e-4, atol=1e-4)
    assert jnp.allclose(sigma, sigma_ref, rtol=1e-4, atol=1e-4)

    print("KERNEL_OK")
</pallas_src>

<mosaic_0001>
module attributes {stable_mosaic.version = 11 : i64} {
  func.func @_mb_mlp_kernel(%arg0: memref<8x96xf32, #tpu.memory_space<vmem>>, %arg1: memref<32x19xf32, #tpu.memory_space<vmem>>, %arg2: memref<19x11xf32, #tpu.memory_space<vmem>>, %arg3: memref<24x15xf32, #tpu.memory_space<vmem>>, %arg4: memref<15x10xf32, #tpu.memory_space<vmem>>, %arg5: memref<40x22xf32, #tpu.memory_space<vmem>>, %arg6: memref<22x13xf32, #tpu.memory_space<vmem>>, %arg7: memref<11x12xf32, #tpu.memory_space<vmem>>, %arg8: memref<10x12xf32, #tpu.memory_space<vmem>>, %arg9: memref<13x12xf32, #tpu.memory_space<vmem>>, %arg10: memref<12x4xf32, #tpu.memory_space<vmem>>, %arg11: memref<1x106xf32, #tpu.memory_space<vmem>>, %arg12: memref<8x4xf32, #tpu.memory_space<vmem>>) attributes {dimension_semantics = [], scalar_prefetch = 0 : i64, scratch_operands = 0 : i64, tpu.core_type = #tpu.core_type<tc>} {
    %c0 = arith.constant 0 : index
    %c0_0 = arith.constant 0 : index
    %0 = vector.load %arg0[%c0, %c0_0] : memref<8x96xf32, #tpu.memory_space<vmem>>, vector<8x96xf32>
    %c0_1 = arith.constant 0 : index
    %c0_2 = arith.constant 0 : index
    %1 = vector.load %arg11[%c0_1, %c0_2] : memref<1x106xf32, #tpu.memory_space<vmem>>, vector<1x106xf32>
    %2 = vector.extract_strided_slice %0 {offsets = [0, 0], sizes = [8, 32], strides = [1, 1]} : vector<8x96xf32> to vector<8x32xf32>
    %c0_3 = arith.constant 0 : index
    %c0_4 = arith.constant 0 : index
    %3 = vector.load %arg1[%c0_3, %c0_4] : memref<32x19xf32, #tpu.memory_space<vmem>>, vector<32x19xf32>
    %cst = arith.constant dense<0.000000e+00> : vector<8x19xf32>
    %4 = tpu.matmul %2, %3, %cst {dimension_numbers = #tpu.dot_dimension_numbers<[1], [0], [0], [1], [0, 0, 1, 1], [], []>} : vector<8x32xf32>, vector<32x19xf32>, vector<8x19xf32> -> vector<8x19xf32>
    %5 = vector.extract_strided_slice %1 {offsets = [0, 0], sizes = [1, 19], strides = [1, 1]} : vector<1x106xf32> to vector<1x19xf32>
    %6 = vector.broadcast %5 : vector<1x19xf32> to vector<8x19xf32>
    %7 = arith.addf %4, %6 : vector<8x19xf32>
    %cst_5 = arith.constant 2.000000e+01 : f32
    %8 = vector.broadcast %cst_5 : f32 to vector<8x19xf32>
    %9 = arith.cmpf ogt, %7, %8 : vector<8x19xf32>
    %cst_6 = arith.constant 2.000000e+01 : f32
    %10 = vector.broadcast %cst_6 : f32 to vector<8x19xf32>
    %11 = arith.minimumf %7, %10 : vector<8x19xf32>
    %12 = math.exp %11 : vector<8x19xf32>
    %13 = math.log1p %12 : vector<8x19xf32>
    %14 = arith.select %9, %7, %13 : vector<8x19xi1>, vector<8x19xf32>
    %c0_7 = arith.constant 0 : index
    %c0_8 = arith.constant 0 : index
    %15 = vector.load %arg2[%c0_7, %c0_8] : memref<19x11xf32, #tpu.memory_space<vmem>>, vector<19x11xf32>
    %cst_9 = arith.constant dense<0.000000e+00> : vector<8x11xf32>
    %16 = tpu.matmul %14, %15, %cst_9 {dimension_numbers = #tpu.dot_dimension_numbers<[1], [0], [0], [1], [0, 0, 1, 1], [], []>} : vector<8x19xf32>, vector<19x11xf32>, vector<8x11xf32> -> vector<8x11xf32>
    %17 = vector.extract_strided_slice %1 {offsets = [0, 19], sizes = [1, 11], strides = [1, 1]} : vector<1x106xf32> to vector<1x11xf32>
    %18 = vector.broadcast %17 : vector<1x11xf32> to vector<8x11xf32>
    %19 = arith.addf %16, %18 : vector<8x11xf32>
    %cst_10 = arith.constant 2.000000e+01 : f32
    %20 = vector.broadcast %cst_10 : f32 to vector<8x11xf32>
    %21 = arith.cmpf ogt, %19, %20 : vector<8x11xf32>
    %cst_11 = arith.constant 2.000000e+01 : f32
    %22 = vector.broadcast %cst_11 : f32 to vector<8x11xf32>
    %23 = arith.minimumf %19, %22 : vector<8x11xf32>
    %24 = math.exp %23 : vector<8x11xf32>
    %25 = math.log1p %24 : vector<8x11xf32>
    %26 = arith.select %21, %19, %25 : vector<8x11xi1>, vector<8x11xf32>
    %27 = vector.extract_strided_slice %0 {offsets = [0, 32], sizes = [8, 24], strides = [1, 1]} : vector<8x96xf32> to vector<8x24xf32>
    %c0_12 = arith.constant 0 : index
    %c0_13 = arith.constant 0 : index
    %28 = vector.load %arg3[%c0_12, %c0_13] : memref<24x15xf32, #tpu.memory_space<vmem>>, vector<24x15xf32>
    %cst_14 = arith.constant dense<0.000000e+00> : vector<8x15xf32>
    %29 = tpu.matmul %27, %28, %cst_14 {dimension_numbers = #tpu.dot_dimension_numbers<[1], [0], [0], [1], [0, 0, 1, 1], [], []>} : vector<8x24xf32>, vector<24x15xf32>, vector<8x15xf32> -> vector<8x15xf32>
    %30 = vector.extract_strided_slice %1 {offsets = [0, 30], sizes = [1, 15], strides = [1, 1]} : vector<1x106xf32> to vector<1x15xf32>
    %31 = vector.broadcast %30 : vector<1x15xf32> to vector<8x15xf32>
    %32 = arith.addf %29, %31 : vector<8x15xf32>
    %cst_15 = arith.constant 2.000000e+01 : f32
    %33 = vector.broadcast %cst_15 : f32 to vector<8x15xf32>
    %34 = arith.cmpf ogt, %32, %33 : vector<8x15xf32>
    %cst_16 = arith.constant 2.000000e+01 : f32
    %35 = vector.broadcast %cst_16 : f32 to vector<8x15xf32>
    %36 = arith.minimumf %32, %35 : vector<8x15xf32>
    %37 = math.exp %36 : vector<8x15xf32>
    %38 = math.log1p %37 : vector<8x15xf32>
    %39 = arith.select %34, %32, %38 : vector<8x15xi1>, vector<8x15xf32>
    %c0_17 = arith.constant 0 : index
    %c0_18 = arith.constant 0 : index
    %40 = vector.load %arg4[%c0_17, %c0_18] : memref<15x10xf32, #tpu.memory_space<vmem>>, vector<15x10xf32>
    %cst_19 = arith.constant dense<0.000000e+00> : vector<8x10xf32>
    %41 = tpu.matmul %39, %40, %cst_19 {dimension_numbers = #tpu.dot_dimension_numbers<[1], [0], [0], [1], [0, 0, 1, 1], [], []>} : vector<8x15xf32>, vector<15x10xf32>, vector<8x10xf32> -> vector<8x10xf32>
    %42 = vector.extract_strided_slice %1 {offsets = [0, 45], sizes = [1, 10], strides = [1, 1]} : vector<1x106xf32> to vector<1x10xf32>
    %43 = vector.broadcast %42 : vector<1x10xf32> to vector<8x10xf32>
    %44 = arith.addf %41, %43 : vector<8x10xf32>
    %cst_20 = arith.constant 2.000000e+01 : f32
    %45 = vector.broadcast %cst_20 : f32 to vector<8x10xf32>
    %46 = arith.cmpf ogt, %44, %45 : vector<8x10xf32>
    %cst_21 = arith.constant 2.000000e+01 : f32
    %47 = vector.broadcast %cst_21 : f32 to vector<8x10xf32>
    %48 = arith.minimumf %44, %47 : vector<8x10xf32>
    %49 = math.exp %48 : vector<8x10xf32>
    %50 = math.log1p %49 : vector<8x10xf32>
    %51 = arith.select %46, %44, %50 : vector<8x10xi1>, vector<8x10xf32>
    %52 = vector.extract_strided_slice %0 {offsets = [0, 56], sizes = [8, 40], strides = [1, 1]} : vector<8x96xf32> to vector<8x40xf32>
    %c0_22 = arith.constant 0 : index
    %c0_23 = arith.constant 0 : index
    %53 = vector.load %arg5[%c0_22, %c0_23] : memref<40x22xf32, #tpu.memory_space<vmem>>, vector<40x22xf32>
    %cst_24 = arith.constant dense<0.000000e+00> : vector<8x22xf32>
    %54 = tpu.matmul %52, %53, %cst_24 {dimension_numbers = #tpu.dot_dimension_numbers<[1], [0], [0], [1], [0, 0, 1, 1], [], []>} : vector<8x40xf32>, vector<40x22xf32>, vector<8x22xf32> -> vector<8x22xf32>
    %55 = vector.extract_strided_slice %1 {offsets = [0, 55], sizes = [1, 22], strides = [1, 1]} : vector<1x106xf32> to vector<1x22xf32>
    %56 = vector.broadcast %55 : vector<1x22xf32> to vector<8x22xf32>
    %57 = arith.addf %54, %56 : vector<8x22xf32>
    %cst_25 = arith.constant 2.000000e+01 : f32
    %58 = vector.broadcast %cst_25 : f32 to vector<8x22xf32>
    %59 = arith.cmpf ogt, %57, %58 : vector<8x22xf32>
    %cst_26 = arith.constant 2.000000e+01 : f32
    %60 = vector.broadcast %cst_26 : f32 to vector<8x22xf32>
    %61 = arith.minimumf %57, %60 : vector<8x22xf32>
    %62 = math.exp %61 : vector<8x22xf32>
    %63 = math.log1p %62 : vector<8x22xf32>
    %64 = arith.select %59, %57, %63 : vector<8x22xi1>, vector<8x22xf32>
    %c0_27 = arith.constant 0 : index
    %c0_28 = arith.constant 0 : index
    %65 = vector.load %arg6[%c0_27, %c0_28] : memref<22x13xf32, #tpu.memory_space<vmem>>, vector<22x13xf32>
    %cst_29 = arith.constant dense<0.000000e+00> : vector<8x13xf32>
    %66 = tpu.matmul %64, %65, %cst_29 {dimension_numbers = #tpu.dot_dimension_numbers<[1], [0], [0], [1], [0, 0, 1, 1], [], []>} : vector<8x22xf32>, vector<22x13xf32>, vector<8x13xf32> -> vector<8x13xf32>
    %67 = vector.extract_strided_slice %1 {offsets = [0, 77], sizes = [1, 13], strides = [1, 1]} : vector<1x106xf32> to vector<1x13xf32>
    %68 = vector.broadcast %67 : vector<1x13xf32> to vector<8x13xf32>
    %69 = arith.addf %66, %68 : vector<8x13xf32>
    %cst_30 = arith.constant 2.000000e+01 : f32
    %70 = vector.broadcast %cst_30 : f32 to vector<8x13xf32>
    %71 = arith.cmpf ogt, %69, %70 : vector<8x13xf32>
    %cst_31 = arith.constant 2.000000e+01 : f32
    %72 = vector.broadcast %cst_31 : f32 to vector<8x13xf32>
    %73 = arith.minimumf %69, %72 : vector<8x13xf32>
    %74 = math.exp %73 : vector<8x13xf32>
    %75 = math.log1p %74 : vector<8x13xf32>
    %76 = arith.select %71, %69, %75 : vector<8x13xi1>, vector<8x13xf32>
    %77 = vector.extract_strided_slice %1 {offsets = [0, 90], sizes = [1, 12], strides = [1, 1]} : vector<1x106xf32> to vector<1x12xf32>
    %c0_32 = arith.constant 0 : index
    %c0_33 = arith.constant 0 : index
    %78 = vector.load %arg7[%c0_32, %c0_33] : memref<11x12xf32, #tpu.memory_space<vmem>>, vector<11x12xf32>
    %cst_34 = arith.constant dense<0.000000e+00> : vector<8x12xf32>
    %79 = tpu.matmul %26, %78, %cst_34 {dimension_numbers = #tpu.dot_dimension_numbers<[1], [0], [0], [1], [0, 0, 1, 1], [], []>} : vector<8x11xf32>, vector<11x12xf32>, vector<8x12xf32> -> vector<8x12xf32>
    %80 = vector.broadcast %77 : vector<1x12xf32> to vector<8x12xf32>
    %81 = arith.addf %80, %79 : vector<8x12xf32>
    %c0_35 = arith.constant 0 : index
    %c0_36 = arith.constant 0 : index
    %82 = vector.load %arg8[%c0_35, %c0_36] : memref<10x12xf32, #tpu.memory_space<vmem>>, vector<10x12xf32>
    %cst_37 = arith.constant dense<0.000000e+00> : vector<8x12xf32>
    %83 = tpu.matmul %51, %82, %cst_37 {dimension_numbers = #tpu.dot_dimension_numbers<[1], [0], [0], [1], [0, 0, 1, 1], [], []>} : vector<8x10xf32>, vector<10x12xf32>, vector<8x12xf32> -> vector<8x12xf32>
    %84 = arith.addf %81, %83 : vector<8x12xf32>
    %c0_38 = arith.constant 0 : index
    %c0_39 = arith.constant 0 : index
    %85 = vector.load %arg9[%c0_38, %c0_39] : memref<13x12xf32, #tpu.memory_space<vmem>>, vector<13x12xf32>
    %cst_40 = arith.constant dense<0.000000e+00> : vector<8x12xf32>
    %86 = tpu.matmul %76, %85, %cst_40 {dimension_numbers = #tpu.dot_dimension_numbers<[1], [0], [0], [1], [0, 0, 1, 1], [], []>} : vector<8x13xf32>, vector<13x12xf32>, vector<8x12xf32> -> vector<8x12xf32>
    %87 = arith.addf %84, %86 : vector<8x12xf32>
    %cst_41 = arith.constant 2.000000e+01 : f32
    %88 = vector.broadcast %cst_41 : f32 to vector<8x12xf32>
    %89 = arith.cmpf ogt, %87, %88 : vector<8x12xf32>
    %cst_42 = arith.constant 2.000000e+01 : f32
    %90 = vector.broadcast %cst_42 : f32 to vector<8x12xf32>
    %91 = arith.minimumf %87, %90 : vector<8x12xf32>
    %92 = math.exp %91 : vector<8x12xf32>
    %93 = math.log1p %92 : vector<8x12xf32>
    %94 = arith.select %89, %87, %93 : vector<8x12xi1>, vector<8x12xf32>
    %c0_43 = arith.constant 0 : index
    %c0_44 = arith.constant 0 : index
    %95 = vector.load %arg10[%c0_43, %c0_44] : memref<12x4xf32, #tpu.memory_space<vmem>>, vector<12x4xf32>
    %cst_45 = arith.constant dense<0.000000e+00> : vector<8x4xf32>
    %96 = tpu.matmul %94, %95, %cst_45 {dimension_numbers = #tpu.dot_dimension_numbers<[1], [0], [0], [1], [0, 0, 1, 1], [], []>} : vector<8x12xf32>, vector<12x4xf32>, vector<8x4xf32> -> vector<8x4xf32>
    %97 = vector.extract_strided_slice %1 {offsets = [0, 102], sizes = [1, 4], strides = [1, 1]} : vector<1x106xf32> to vector<1x4xf32>
    %98 = vector.broadcast %97 : vector<1x4xf32> to vector<8x4xf32>
    %99 = arith.addf %96, %98 : vector<8x4xf32>
    %100 = tpu.iota {dimensions = array<i32: 1>} : vector<8x4xi32>
    %c2_i32 = arith.constant 2 : i32
    %101 = vector.broadcast %c2_i32 : i32 to vector<8x4xi32>
    %102 = arith.cmpi sge, %100, %101 : vector<8x4xi32>
    %cst_46 = arith.constant 2.000000e+01 : f32
    %103 = vector.broadcast %cst_46 : f32 to vector<8x4xf32>
    %104 = arith.cmpf ogt, %99, %103 : vector<8x4xf32>
    %cst_47 = arith.constant 2.000000e+01 : f32
    %105 = vector.broadcast %cst_47 : f32 to vector<8x4xf32>
    %106 = arith.minimumf %99, %105 : vector<8x4xf32>
    %107 = math.exp %106 : vector<8x4xf32>
    %108 = math.log1p %107 : vector<8x4xf32>
    %109 = arith.select %104, %99, %108 : vector<8x4xi1>, vector<8x4xf32>
    %110 = arith.select %102, %109, %99 : vector<8x4xi1>, vector<8x4xf32>
    %c0_48 = arith.constant 0 : index
    %c0_49 = arith.constant 0 : index
    %111 = vector.load %arg12[%c0_48, %c0_49] : memref<8x4xf32, #tpu.memory_space<vmem>>, vector<8x4xf32>
    tpu.vector_store %arg12[%c0_48, %c0_49], %110 {strides = array<i32>} : memref<8x4xf32, #tpu.memory_space<vmem>>, vector<8x4xf32>,
    return
  }
}

</mosaic_0001>

<llo_original>
// kernel: tpu_custom_call.1
$region0: #{tpu_custom_call.1}
  #allocation0 [shape = 'u32[]', space=smem, size = 0x4, offset = 0x4, fixed_abs, tag = 'smem constant byte address 0x4 - core index']
  #allocation1 [shape = 'u32[72,128]{1,0:T(1,128)}', space=vmem, size = 0x9000, scoped, tag = 'internal scratch']
  %s0 = inlined_call_operand.vmem [shape: f32[8,96], index: 0, kind: input, shape index: {}]
  %s1 = inlined_call_operand.vmem [shape: f32[32,19], index: 1, kind: input, shape index: {}]
  %s2 = inlined_call_operand.vmem [shape: f32[19,11], index: 2, kind: input, shape index: {}]
  %s3 = inlined_call_operand.vmem [shape: f32[24,15], index: 3, kind: input, shape index: {}]
  %s4 = inlined_call_operand.vmem [shape: f32[15,10], index: 4, kind: input, shape index: {}]
  %s5 = inlined_call_operand.vmem [shape: f32[40,22], index: 5, kind: input, shape index: {}]
  %s6 = inlined_call_operand.vmem [shape: f32[22,13], index: 6, kind: input, shape index: {}]
  %s7 = inlined_call_operand.vmem [shape: f32[11,12], index: 7, kind: input, shape index: {}]
  %s8 = inlined_call_operand.vmem [shape: f32[10,12], index: 8, kind: input, shape index: {}]
  %s9 = inlined_call_operand.vmem [shape: f32[13,12], index: 9, kind: input, shape index: {}]
  %s10 = inlined_call_operand.vmem [shape: f32[12,4], index: 10, kind: input, shape index: {}]
  %s11 = inlined_call_operand.vmem [shape: f32[1,106], index: 11, kind: input, shape index: {}]
  %s12 = inlined_call_operand.vmem [shape: f32[8,4], index: 12, kind: output, shape index: {}]
  %s13 = sld [smem:[#allocation0]]
  $region58: #{tpu_custom_call.1} parent=0
    _
  %s15 = ssub.s32 1, %s13
  %s16 = scalar_select 0, %s15, %s13
  // Predicated region
  $region2: #{tpu_custom_call.1} parent=0 // pred_check
    _
  $region3: #{tpu_custom_call.1} parent=0 // pred_check_branch
    %18 = sbr.rel (0) target = $region5
  $region4: #{tpu_custom_call.1} parent=0 // pred_region
    _
  $region5: #{tpu_custom_call.1} parent=0 // pred_fallthru
    _
  // Predicated region
  $region6: #{tpu_custom_call.1} parent=0 // pred_check
    _
  $region7: #{tpu_custom_call.1} parent=0 // pred_check_branch
    %20 = sbr.rel (0) target = $region9
  $region8: #{tpu_custom_call.1} parent=0 // pred_region
    _
  $region9: #{tpu_custom_call.1} parent=0 // pred_fallthru
    _
  // Predicated region
  $region10: #{tpu_custom_call.1} parent=0 // pred_check
    _
  $region11: #{tpu_custom_call.1} parent=0 // pred_check_branch
    %22 = sbr.rel (0) target = $region13
  $region12: #{tpu_custom_call.1} parent=0 // pred_region
    _
  $region13: #{tpu_custom_call.1} parent=0 // pred_fallthru
    _
  // Predicated region
  $region14: #{tpu_custom_call.1} parent=0 // pred_check
    _
  $region15: #{tpu_custom_call.1} parent=0 // pred_check_branch
    %24 = sbr.rel (0) target = $region17
  $region16: #{tpu_custom_call.1} parent=0 // pred_region
    _
  $region17: #{tpu_custom_call.1} parent=0 // pred_fallthru
    _
  // Predicated region
  $region18: #{tpu_custom_call.1} parent=0 // pred_check
    _
  $region19: #{tpu_custom_call.1} parent=0 // pred_check_branch
    %26 = sbr.rel (0) target = $region21
  $region20: #{tpu_custom_call.1} parent=0 // pred_region
    _
  $region21: #{tpu_custom_call.1} parent=0 // pred_fallthru
    _
  // Predicated region
  $region22: #{tpu_custom_call.1} parent=0 // pred_check
    _
  $region23: #{tpu_custom_call.1} parent=0 // pred_check_branch
    %28 = sbr.rel (0) target = $region25
  $region24: #{tpu_custom_call.1} parent=0 // pred_region
    _
  $region25: #{tpu_custom_call.1} parent=0 // pred_fallthru
    _
  // Predicated region
  $region26: #{tpu_custom_call.1} parent=0 // pred_check
    _
  $region27: #{tpu_custom_call.1} parent=0 // pred_check_branch
    %30 = sbr.rel (0) target = $region29
  $region28: #{tpu_custom_call.1} parent=0 // pred_region
    _
  $region29: #{tpu_custom_call.1} parent=0 // pred_fallthru
    _
  // Predicated region
  $region30: #{tpu_custom_call.1} parent=0 // pred_check
    _
  $region31: #{tpu_custom_call.1} parent=0 // pred_check_branch
    %32 = sbr.rel (0) target = $region33
  $region32: #{tpu_custom_call.1} parent=0 // pred_region
    _
  $region33: #{tpu_custom_call.1} parent=0 // pred_fallthru
    _
  // Predicated region
  $region34: #{tpu_custom_call.1} parent=0 // pred_check
    _
  $region35: #{tpu_custom_call.1} parent=0 // pred_check_branch
    %34 = sbr.rel (0) target = $region37
  $region36: #{tpu_custom_call.1} parent=0 // pred_region
    _
  $region37: #{tpu_custom_call.1} parent=0 // pred_fallthru
    _
  // Predicated region
  $region38: #{tpu_custom_call.1} parent=0 // pred_check
    _
  $region39: #{tpu_custom_call.1} parent=0 // pred_check_branch
    %36 = sbr.rel (0) target = $region41
  $region40: #{tpu_custom_call.1} parent=0 // pred_region
    _
  $region41: #{tpu_custom_call.1} parent=0 // pred_fallthru
    _
  // Predicated region
  $region42: #{tpu_custom_call.1} parent=0 // pred_check
    _
  $region43: #{tpu_custom_call.1} parent=0 // pred_check_branch
    %38 = sbr.rel (0) target = $region45
  $region44: #{tpu_custom_call.1} parent=0 // pred_region
    _
  $region45: #{tpu_custom_call.1} parent=0 // pred_fallthru
    _
  // Predicated region
  $region46: #{tpu_custom_call.1} parent=0 // pred_check
    _
  $region47: #{tpu_custom_call.1} parent=0 // pred_check_branch
    %40 = sbr.rel (0) target = $region49
  $region48: #{tpu_custom_call.1} parent=0 // pred_region
    _
  $region49: #{tpu_custom_call.1} parent=0 // pred_fallthru
    _
  %v41 = vld [vmem:[%s0] sm:$0xff]
  %v42 = vld [vmem:[%s11] sm:$0x1]
  %v43 = vld [vmem:[%s1] sm:$0xff]
  %v44 = vld [vmem:[%s1 + $0x8] sm:$0xff]
  %v45 = vld [vmem:[%s1 + $0x10] sm:$0xff]
  %v46 = vld [vmem:[%s1 + $0x18] sm:$0xff]
  %v48 = vperm.slane %v42, 0
  %vm50 = vcmask 261120
  %v52 = vsel %vm50, %v41, 0
  %54 = vmatpush.msra.mxu0 0.0
  %55 = vmatpush.msra.mxu0 0.0
  %56 = vmatpush.msra.mxu0 0.0
  %57 = vmatpush.msra.mxu0 0.0
  %58 = vmatpush.msra.mxu0 0.0
  %59 = vmatpush.msra.mxu0 0.0
  %60 = vmatpush.msra.mxu0 0.0
  %61 = vmatpush.msra.mxu0 0.0
  %62 = vmatpush.msra.mxu0 0.0
  %63 = vmatpush.msra.mxu0 0.0
  %64 = vmatpush.msra.mxu0 0.0
  %65 = vmatpush.msra.mxu0 0.0
  %66 = vmatpush.msra.mxu0 %v46
  %67 = vmatpush.msra.mxu0 %v45
  %68 = vmatpush.msra.mxu0 %v44
  %69 = vmatpush.msra.mxu0 %v43
  %70 = vmatmul.f32.gmra.mxu0 %v52
  %v71 = vpop.f32.mrf.mxu0
  %v72 = vadd.f32 %v48, %v71
  %73 = vdwg.mxu0
  %vm74 = vcmp.gt.f32.partialorder %v72, 20.0
  %v75 = vmin.f32 %v72, 20.0
  %v76 = vmul.f32 %v75, 1.442695
  %v77 = vpow.pop %v76
  %v78 = vadd.f32 %v77, 1.0
  %v79 = vlog2.pop %v78
  %v80 = vmul.f32 %v79, 0.6931472
  %v81 = vmul.f32 -0.5, %v77
  %v82 = vadd.f32 %v81, 1.0
  %v83 = vmul.f32 %v82, %v77
  %v84 = vand.u32 2147483647, %v77
  %vm85 = vcmp.lt.f32.partialorder %v84, 0.0004427343
  %v86 = vsel %vm85, %v83, %v80
  %v87 = vsel %vm74, %v72, %v86
  %v88 = vld [vmem:[%s2] sm:$0xff]
  %v89 = vld [vmem:[%s2 + $0x8] sm:$0xff]
  %v90 = vld [vmem:[%s2 + $0x10] sm:$0x7]
  %91 = vrot.lane.b32.xlu0 %v48, 109
  %v92 = vpop.permute.xlu0 %91
  %vm94 = vcmask 154624
  %v96 = vsel %vm94, %v87, 0
  %vm98 = vcmask 1042432
  %v100 = vsel %vm98, %v90, 0
  %102 = vmatpush.msra.mxu0 0.0
  %103 = vmatpush.msra.mxu0 0.0
  %104 = vmatpush.msra.mxu0 0.0
  %105 = vmatpush.msra.mxu0 0.0
  %106 = vmatpush.msra.mxu0 0.0
  %107 = vmatpush.msra.mxu0 0.0
  %108 = vmatpush.msra.mxu0 0.0
  %109 = vmatpush.msra.mxu0 0.0
  %110 = vmatpush.msra.mxu0 0.0
  %111 = vmatpush.msra.mxu0 0.0
  %112 = vmatpush.msra.mxu0 0.0
  %113 = vmatpush.msra.mxu0 0.0
  %114 = vmatpush.msra.mxu0 0.0
  %115 = vmatpush.msra.mxu0 %v100
  %116 = vmatpush.msra.mxu0 %v89
  %117 = vmatpush.msra.mxu0 %v88
  %118 = vmatmul.f32.gmra.mxu0 %v96
  %v119 = vpop.f32.mrf.mxu0
  %v120 = vadd.f32 %v92, %v119
  %121 = vdwg.mxu0
  %vm122 = vcmp.gt.f32.partialorder %v120, 20.0
  %v123 = vmin.f32 %v120, 20.0
  %v124 = vmul.f32 %v123, 1.442695
  %v125 = vpow.pop %v124
  %v126 = vadd.f32 %v125, 1.0
  %v127 = vlog2.pop %v126
  %v128 = vmul.f32 %v127, 0.6931472
  %v129 = vmul.f32 -0.5, %v125
  %v130 = vadd.f32 %v129, 1.0
  %v131 = vmul.f32 %v130, %v125
  %v132 = vand.u32 2147483647, %v125
  %vm133 = vcmp.lt.f32.partialorder %v132, 0.0004427343
  %v134 = vsel %vm133, %v131, %v128
  %v135 = vsel %vm122, %v120, %v134
  %v136 = vld [vmem:[%s3] sm:$0xff]
  %v137 = vld [vmem:[%s3 + $0x8] sm:$0xff]
  %v138 = vld [vmem:[%s3 + $0x10] sm:$0xff]
  %139 = vrot.lane.b32.xlu0 %v41, 96
  %v140 = vpop.permute.xlu0 %139
  %141 = vrot.lane.b32.xlu0 %v48, 98
  %v142 = vpop.permute.xlu0 %141
  %vm144 = vcmask 195584
  %v145 = vsel %vm144, %v140, 0
  %147 = vmatpush.msra.mxu0 0.0
  %148 = vmatpush.msra.mxu0 0.0
  %149 = vmatpush.msra.mxu0 0.0
  %150 = vmatpush.msra.mxu0 0.0
  %151 = vmatpush.msra.mxu0 0.0
  %152 = vmatpush.msra.mxu0 0.0
  %153 = vmatpush.msra.mxu0 0.0
  %154 = vmatpush.msra.mxu0 0.0
  %155 = vmatpush.msra.mxu0 0.0
  %156 = vmatpush.msra.mxu0 0.0
  %157 = vmatpush.msra.mxu0 0.0
  %158 = vmatpush.msra.mxu0 0.0
  %159 = vmatpush.msra.mxu0 0.0
  %160 = vmatpush.msra.mxu0 %v138
  %161 = vmatpush.msra.mxu0 %v137
  %162 = vmatpush.msra.mxu0 %v136
  %163 = vmatmul.f32.gmra.mxu0 %v145
  %v164 = vpop.f32.mrf.mxu0
  %v165 = vadd.f32 %v142, %v164
  %166 = vdwg.mxu0
  %vm167 = vcmp.gt.f32.partialorder %v165, 20.0
  %v168 = vmin.f32 %v165, 20.0
  %v169 = vmul.f32 %v168, 1.442695
  %v170 = vpow.pop %v169
  %v171 = vadd.f32 %v170, 1.0
  %v172 = vlog2.pop %v171
  %v173 = vmul.f32 %v172, 0.6931472
  %v174 = vmul.f32 -0.5, %v170
  %v175 = vadd.f32 %v174, 1.0
  %v176 = vmul.f32 %v175, %v170
  %v177 = vand.u32 2147483647, %v170
  %vm178 = vcmp.lt.f32.partialorder %v177, 0.0004427343
  %v179 = vsel %vm178, %v176, %v173
  %v180 = vsel %vm167, %v165, %v179
  %v181 = vld [vmem:[%s4] sm:$0xff]
  %v182 = vld [vmem:[%s4 + $0x8] sm:$0x7f]
  %183 = vrot.lane.b32.xlu0 %v48, 83
  %v184 = vpop.permute.xlu0 %183
  %vm186 = vcmask 121856
  %v188 = vsel %vm186, %v180, 0
  %vm190 = vcmask 1046528
  %v192 = vsel %vm190, %v182, 0
  %194 = vmatpush.msra.mxu0 0.0
  %195 = vmatpush.msra.mxu0 0.0
  %196 = vmatpush.msra.mxu0 0.0
  %197 = vmatpush.msra.mxu0 0.0
  %198 = vmatpush.msra.mxu0 0.0
  %199 = vmatpush.msra.mxu0 0.0
  %200 = vmatpush.msra.mxu0 0.0
  %201 = vmatpush.msra.mxu0 0.0
  %202 = vmatpush.msra.mxu0 0.0
  %203 = vmatpush.msra.mxu0 0.0
  %204 = vmatpush.msra.mxu0 0.0
  %205 = vmatpush.msra.mxu0 0.0
  %206 = vmatpush.msra.mxu0 0.0
  %207 = vmatpush.msra.mxu0 0.0
  %208 = vmatpush.msra.mxu0 %v192
  %209 = vmatpush.msra.mxu0 %v181
  %210 = vmatmul.f32.gmra.mxu0 %v188
  %v211 = vpop.f32.mrf.mxu0
  %v212 = vadd.f32 %v184, %v211
  %213 = vdwg.mxu0
  %vm214 = vcmp.gt.f32.partialorder %v212, 20.0
  %v215 = vmin.f32 %v212, 20.0
  %v216 = vmul.f32 %v215, 1.442695
  %v217 = vpow.pop %v216
  %v218 = vadd.f32 %v217, 1.0
  %v219 = vlog2.pop %v218
  %v220 = vmul.f32 %v219, 0.6931472
  %v221 = vmul.f32 -0.5, %v217
  %v222 = vadd.f32 %v221, 1.0
  %v223 = vmul.f32 %v222, %v217
  %v224 = vand.u32 2147483647, %v217
  %vm225 = vcmp.lt.f32.partialorder %v224, 0.0004427343
  %v226 = vsel %vm225, %v223, %v220
  %v227 = vsel %vm214, %v212, %v226
  %v228 = vld [vmem:[%s5] sm:$0xff]
  %v229 = vld [vmem:[%s5 + $0x8] sm:$0xff]
  %v230 = vld [vmem:[%s5 + $0x10] sm:$0xff]
  %v231 = vld [vmem:[%s5 + $0x18] sm:$0xff]
  %v232 = vld [vmem:[%s5 + $0x20] sm:$0xff]
  %233 = vrot.lane.b32.xlu0 %v41, 72
  %v234 = vpop.permute.xlu0 %233
  %235 = vrot.lane.b32.xlu0 %v48, 73
  %v236 = vpop.permute.xlu0 %235
  %vm238 = vcmask 326656
  %v239 = vsel %vm238, %v234, 0
  %241 = vmatpush.msra.mxu0 0.0
  %242 = vmatpush.msra.mxu0 0.0
  %243 = vmatpush.msra.mxu0 0.0
  %244 = vmatpush.msra.mxu0 0.0
  %245 = vmatpush.msra.mxu0 0.0
  %246 = vmatpush.msra.mxu0 0.0
  %247 = vmatpush.msra.mxu0 0.0
  %248 = vmatpush.msra.mxu0 0.0
  %249 = vmatpush.msra.mxu0 0.0
  %250 = vmatpush.msra.mxu0 0.0
  %251 = vmatpush.msra.mxu0 0.0
  %252 = vmatpush.msra.mxu0 %v232
  %253 = vmatpush.msra.mxu0 %v231
  %254 = vmatpush.msra.mxu0 %v230
  %255 = vmatpush.msra.mxu0 %v229
  %256 = vmatpush.msra.mxu0 %v228
  %257 = vmatmul.f32.gmra.mxu0 %v239
  %v258 = vpop.f32.mrf.mxu0
  %v259 = vadd.f32 %v236, %v258
  %260 = vdwg.mxu0
  %vm261 = vcmp.gt.f32.partialorder %v259, 20.0
  %v262 = vmin.f32 %v259, 20.0
  %v263 = vmul.f32 %v262, 1.442695
  %v264 = vpow.pop %v263
  %v265 = vadd.f32 %v264, 1.0
  %v266 = vlog2.pop %v265
  %v267 = vmul.f32 %v266, 0.6931472
  %v268 = vmul.f32 -0.5, %v264
  %v269 = vadd.f32 %v268, 1.0
  %v270 = vmul.f32 %v269, %v264
  %v271 = vand.u32 2147483647, %v264
  %vm272 = vcmp.lt.f32.partialorder %v271, 0.0004427343
  %v273 = vsel %vm272, %v270, %v267
  %v274 = vsel %vm261, %v259, %v273
  %v275 = vld [vmem:[%s6] sm:$0xff]
  %v276 = vld [vmem:[%s6 + $0x8] sm:$0xff]
  %v277 = vld [vmem:[%s6 + $0x10] sm:$0x3f]
  %278 = vrot.lane.b32.xlu0 %v48, 51
  %v279 = vpop.permute.xlu0 %278
  %vm281 = vcmask 179200
  %v283 = vsel %vm281, %v274, 0
  %vm285 = vcmask 1045504
  %v287 = vsel %vm285, %v277, 0
  %289 = vmatpush.msra.mxu0 0.0
  %290 = vmatpush.msra.mxu0 0.0
  %291 = vmatpush.msra.mxu0 0.0
  %292 = vmatpush.msra.mxu0 0.0
  %293 = vmatpush.msra.mxu0 0.0
  %294 = vmatpush.msra.mxu0 0.0
  %295 = vmatpush.msra.mxu0 0.0
  %296 = vmatpush.msra.mxu0 0.0
  %297 = vmatpush.msra.mxu0 0.0
  %298 = vmatpush.msra.mxu0 0.0
  %299 = vmatpush.msra.mxu0 0.0
  %300 = vmatpush.msra.mxu0 0.0
  %301 = vmatpush.msra.mxu0 0.0
  %302 = vmatpush.msra.mxu0 %v287
  %303 = vmatpush.msra.mxu0 %v276
  %304 = vmatpush.msra.mxu0 %v275
  %305 = vmatmul.f32.gmra.mxu0 %v283
  %v306 = vpop.f32.mrf.mxu0
  %v307 = vadd.f32 %v279, %v306
  %308 = vdwg.mxu0
  %vm309 = vcmp.gt.f32.partialorder %v307, 20.0
  %v310 = vmin.f32 %v307, 20.0
  %v311 = vmul.f32 %v310, 1.442695
  %v312 = vpow.pop %v311
  %v313 = vadd.f32 %v312, 1.0
  %v314 = vlog2.pop %v313
  %v315 = vmul.f32 %v314, 0.6931472
  %v316 = vmul.f32 -0.5, %v312
  %v317 = vadd.f32 %v316, 1.0
  %v318 = vmul.f32 %v317, %v312
  %v319 = vand.u32 2147483647, %v312
  %vm320 = vcmp.lt.f32.partialorder %v319, 0.0004427343
  %v321 = vsel %vm320, %v318, %v315
  %v322 = vsel %vm309, %v307, %v321
  %v323 = vld [vmem:[%s7] sm:$0xff]
  %v324 = vld [vmem:[%s7 + $0x8] sm:$0x7]
  %vm325 = vcmask 89088
  %v327 = vsel %vm325, %v135, 0
  %v330 = vsel %vm98, %v324, 0
  %332 = vmatpush.msra.mxu0 0.0
  %333 = vmatpush.msra.mxu0 0.0
  %334 = vmatpush.msra.mxu0 0.0
  %335 = vmatpush.msra.mxu0 0.0
  %336 = vmatpush.msra.mxu0 0.0
  %337 = vmatpush.msra.mxu0 0.0
  %338 = vmatpush.msra.mxu0 0.0
  %339 = vmatpush.msra.mxu0 0.0
  %340 = vmatpush.msra.mxu0 0.0
  %341 = vmatpush.msra.mxu0 0.0
  %342 = vmatpush.msra.mxu0 0.0
  %343 = vmatpush.msra.mxu0 0.0
  %344 = vmatpush.msra.mxu0 0.0
  %345 = vmatpush.msra.mxu0 0.0
  %346 = vmatpush.msra.mxu0 %v330
  %347 = vmatpush.msra.mxu0 %v323
  %348 = vmatmul.f32.gmra.mxu0 %v327
  %v349 = vpop.f32.mrf.mxu0
  %v350 = vadd.f32 0.0, %v349
  %351 = vdwg.mxu0
  %353 = vrot.lane.b32.xlu0 %v350, 90
  %v354 = vpop.permute.xlu0 %353
  %v356 = vadd.f32 %v48, %v354
  %v357 = vld [vmem:[%s8] sm:$0xff]
  %v358 = vld [vmem:[%s8 + $0x8] sm:$0x3]
  %vm359 = vcmask 80896
  %v361 = vsel %vm359, %v227, 0
  %vm363 = vcmask 1041408
  %v365 = vsel %vm363, %v358, 0
  %367 = vmatpush.msra.mxu0 0.0
  %368 = vmatpush.msra.mxu0 0.0
  %369 = vmatpush.msra.mxu0 0.0
  %370 = vmatpush.msra.mxu0 0.0
  %371 = vmatpush.msra.mxu0 0.0
  %372 = vmatpush.msra.mxu0 0.0
  %373 = vmatpush.msra.mxu0 0.0
  %374 = vmatpush.msra.mxu0 0.0
  %375 = vmatpush.msra.mxu0 0.0
  %376 = vmatpush.msra.mxu0 0.0
  %377 = vmatpush.msra.mxu0 0.0
  %378 = vmatpush.msra.mxu0 0.0
  %379 = vmatpush.msra.mxu0 0.0
  %380 = vmatpush.msra.mxu0 0.0
  %381 = vmatpush.msra.mxu0 %v365
  %382 = vmatpush.msra.mxu0 %v357
  %383 = vmatmul.f32.gmra.mxu0 %v361
  %v384 = vpop.f32.mrf.mxu0
  %v385 = vadd.f32 0.0, %v384
  %386 = vdwg.mxu0
  %388 = vrot.lane.b32.xlu0 %v385, 90
  %v389 = vpop.permute.xlu0 %388
  %v391 = vadd.f32 %v356, %v389
  %v392 = vld [vmem:[%s9] sm:$0xff]
  %v393 = vld [vmem:[%s9 + $0x8] sm:$0x1f]
  %vm394 = vcmask 105472
  %v396 = vsel %vm394, %v322, 0
  %vm398 = vcmask 1044480
  %v400 = vsel %vm398, %v393, 0
  %402 = vmatpush.msra.mxu0 0.0
  %403 = vmatpush.msra.mxu0 0.0
  %404 = vmatpush.msra.mxu0 0.0
  %405 = vmatpush.msra.mxu0 0.0
  %406 = vmatpush.msra.mxu0 0.0
  %407 = vmatpush.msra.mxu0 0.0
  %408 = vmatpush.msra.mxu0 0.0
  %409 = vmatpush.msra.mxu0 0.0
  %410 = vmatpush.msra.mxu0 0.0
  %411 = vmatpush.msra.mxu0 0.0
  %412 = vmatpush.msra.mxu0 0.0
  %413 = vmatpush.msra.mxu0 0.0
  %414 = vmatpush.msra.mxu0 0.0
  %415 = vmatpush.msra.mxu0 0.0
  %416 = vmatpush.msra.mxu0 %v400
  %417 = vmatpush.msra.mxu0 %v392
  %418 = vmatmul.f32.gmra.mxu0 %v396
  %v419 = vpop.f32.mrf.mxu0
  %v420 = vadd.f32 0.0, %v419
  %421 = vdwg.mxu0
  %423 = vrot.lane.b32.xlu0 %v420, 90
  %v424 = vpop.permute.xlu0 %423
  %v426 = vadd.f32 %v391, %v424
  %vm427 = vcmp.gt.f32.partialorder %v426, 20.0
  %v428 = vmin.f32 %v426, 20.0
  %v429 = vmul.f32 %v428, 1.442695
  %v430 = vpow.pop %v429
  %v431 = vadd.f32 %v430, 1.0
  %v432 = vlog2.pop %v431
  %v433 = vmul.f32 %v432, 0.6931472
  %v434 = vmul.f32 -0.5, %v430
  %v435 = vadd.f32 %v434, 1.0
  %v436 = vmul.f32 %v435, %v430
  %v437 = vand.u32 2147483647, %v430
  %vm438 = vcmp.lt.f32.partialorder %v437, 0.0004427343
  %v439 = vsel %vm438, %v436, %v433
  %v440 = vsel %vm427, %v426, %v439
  %v441 = vld [vmem:[%s10] sm:$0xff]
  %v442 = vld [vmem:[%s10 + $0x8] sm:$0xf]
  %444 = vrot.lane.b32.xlu0 %v440, 38
  %v445 = vpop.permute.xlu0 %444
  %446 = vrot.lane.b32.xlu0 %v48, 26
  %v447 = vpop.permute.xlu0 %446
  %vm449 = vcmask 97280
  %v450 = vsel %vm449, %v445, 0
  %vm452 = vcmask 1043456
  %v454 = vsel %vm452, %v442, 0
  %456 = vmatpush.msra.mxu0 0.0
  %457 = vmatpush.msra.mxu0 0.0
  %458 = vmatpush.msra.mxu0 0.0
  %459 = vmatpush.msra.mxu0 0.0
  %460 = vmatpush.msra.mxu0 0.0
  %461 = vmatpush.msra.mxu0 0.0
  %462 = vmatpush.msra.mxu0 0.0
  %463 = vmatpush.msra.mxu0 0.0
  %464 = vmatpush.msra.mxu0 0.0
  %465 = vmatpush.msra.mxu0 0.0
  %466 = vmatpush.msra.mxu0 0.0
  %467 = vmatpush.msra.mxu0 0.0
  %468 = vmatpush.msra.mxu0 0.0
  %469 = vmatpush.msra.mxu0 0.0
  %470 = vmatpush.msra.mxu0 %v454
  %471 = vmatpush.msra.mxu0 %v441
  %472 = vmatmul.f32.gmra.mxu0 %v450
  %v473 = vpop.f32.mrf.mxu0
  %v474 = vadd.f32 %v447, %v473
  %475 = vdwg.mxu0
  %v476 = vlaneseq
  %v477 = vand.u32 %v476, 127
  %vm478 = vcmp.ge.s32.totalorder %v477, 2
  %vm479 = vcmp.gt.f32.partialorder %v474, 20.0
  %v480 = vmin.f32 %v474, 20.0
  %v481 = vmul.f32 %v480, 1.442695
  %v482 = vpow.pop %v481
  %v483 = vadd.f32 %v482, 1.0
  %v484 = vlog2.pop %v483
  %v485 = vmul.f32 %v484, 0.6931472
  %v486 = vmul.f32 -0.5, %v482
  %v487 = vadd.f32 %v486, 1.0
  %v488 = vmul.f32 %v487, %v482
  %v489 = vand.u32 2147483647, %v482
  %vm490 = vcmp.lt.f32.partialorder %v489, 0.0004427343
  %v491 = vsel %vm490, %v488, %v485
  %v492 = vsel %vm479, %v474, %v491
  %v493 = vsel %vm478, %v492, %v474
  %vm494 = vcmask 31744
  %495 = vst.msk [vmem:[%s12] sm:$0xff] %vm494, %v493
  // Predicated region
  $region50: #{tpu_custom_call.1} parent=0 // pred_check
    _
  $region51: #{tpu_custom_call.1} parent=0 // pred_check_branch
    %497 = sbr.rel (0) target = $region53
  $region52: #{tpu_custom_call.1} parent=0 // pred_region
    _
  $region53: #{tpu_custom_call.1} parent=0 // pred_fallthru
    _
  // Predicated region
  $region54: #{tpu_custom_call.1} parent=0 // pred_check
    _
  $region55: #{tpu_custom_call.1} parent=0 // pred_check_branch
    %499 = sbr.rel (0) target = $region57
  $region56: #{tpu_custom_call.1} parent=0 // pred_region
    _
  $region57: #{tpu_custom_call.1} parent=0 // pred_fallthru
    _

</llo_original>
